<compile_context>
chip_gen: v6e
topology: v6e:2x2x1
jax: 0.10.0
libtpu: 0.0.40
codegen_flags: <defaults>
</compile_context>

<pallas_src>
import jax
import jax.numpy as jnp
from jax.experimental import pallas as pl
from jax.experimental.pallas import tpu as pltpu


def _round_up(x, m):
    return ((x + m - 1) // m) * m


def _choose_row_tile(R, max_tile=2048):
    """Largest balanced row tile (multiple of 8, <= max_tile)."""
    n_chunks = max(1, -(-R // max_tile))        # cdiv(R, max_tile)
    tr = -(-R // n_chunks)                      # balanced chunk size
    tr = min(max_tile, max(8, _round_up(tr, 8)))
    # Keep >= 2 grid steps whenever R >= 16 so the "parallel" grid axis can be
    # sharded across the two v7x TensorCores (no-op on single-TC v5e/v6e).
    if R >= 16 and _round_up(R, tr) // tr < 2:
        tr = max(8, _round_up(-(-R // 2), 8))
    return tr


def _make_kernel(mxu_dtype):
    """Build the row-block kernel; `mxu_dtype` is the MXU operand dtype."""

    def _agg_kernel(self_ref, extra_ref, neigh_ref, nw_ref,
                    tile_ref, w1bd_ref, w1b_ref, w2blk_ref, pexp_ref,
                    w3a_ref, w3brep_ref, out_ref):
        """Per row-block kernel.

        self_ref  : (TR, D)      self vectors
        extra_ref : (TR, D)      extra (target-session) vectors
        neigh_ref : (TR, M*D)    lane-dense neighbor slab (block m = lanes m*D:(m+1)*D)
        nw_ref    : (TR, M)      neighbor weights
        tile_ref  : (D, M*D)     [I_D | I_D | ...]     lane-replicator for extra
        w1bd_ref  : (M*D, M*D)   kron(I_M, w1[:D])     block-diagonal w_1 (vector part)
        w1b_ref   : (M, M*D)     kron(I_M, w1[D])      w_1 row for the neighbor weight
        w2blk_ref : (M*D, M)     kron(I_M, w_2)        per-neighbor-block w_2 contraction
        pexp_ref  : (M, M*D)     kron(I_M, ones(1,D))  softmax-prob lane expander
        w3a_ref   : (D, D)       w_3[:D]
        w3brep_ref: (M*D, D)     tile(w_3[D:], (M,1))  block-sum folded into w_3
        out_ref   : (TR, D)
        """
        f32 = jnp.float32
        md = mxu_dtype
        ev = extra_ref[...].astype(f32)                                   # (TR, D)
        nv = neigh_ref[...].astype(f32)                                   # (TR, M*D)
        nw = nw_ref[...].astype(f32)                                      # (TR, M)

        # extra vector replicated across the M neighbor blocks (one MXU op,
        # no lane shuffles / per-neighbor unrolled loops).
        ev_rep = jnp.dot(ev.astype(md), tile_ref[...],
                         preferred_element_type=f32)                      # (TR, M*D)
        prod = ev_rep * nv                                                # (TR, M*D)

        # cat([extra * neighbor, neighbor_weight], -1) @ w_1, all M neighbors
        # at once: block-diagonal matmul + small nw matmul.
        pre = (jnp.dot(prod.astype(md), w1bd_ref[...], preferred_element_type=f32)
               + jnp.dot(nw.astype(md), w1b_ref[...], preferred_element_type=f32))
        alpha = jnp.maximum(pre, 0.2 * pre)        # leaky_relu(slope=0.2), 2 VALU ops

        # per-neighbor attention score: block-wise contraction with w_2.
        s = jnp.dot(alpha.astype(md), w2blk_ref[...],
                    preferred_element_type=f32)                           # (TR, M)

        # softmax over the M neighbors (lane axis).
        s_max = jnp.max(s, axis=1, keepdims=True)
        e = jnp.exp(s - s_max)
        denom = jnp.sum(e, axis=1, keepdims=True)
        inv = pl.reciprocal(denom, approx=True)       # EUP slot
        inv = inv * (2.0 - denom * inv)               # one Newton step -> near-exact
        p = e * inv                                                       # (TR, M)

        # weighted neighbor aggregation fused with the w_3 contraction:
        # expand p over lanes, multiply, contract with tile(w3b, (M,1)).
        p_rep = jnp.dot(p.astype(md), pexp_ref[...],
                        preferred_element_type=f32)                       # (TR, M*D)
        wnv = p_rep * nv                                                  # (TR, M*D)

        # cat([self, sum_m p*neigh], -1) @ w_3 (split + folded form);
        # dropout = eval identity; relu.
        sv = self_ref[...].astype(f32)
        out = (jnp.dot(sv.astype(md), w3a_ref[...], preferred_element_type=f32)
               + jnp.dot(wnv.astype(md), w3brep_ref[...],
                         preferred_element_type=f32))                     # (TR, D)
        out_ref[...] = jnp.maximum(out, 0.0).astype(out_ref.dtype)

    return _agg_kernel


def global_aggregator_forward(self_vectors, neighbor_vector, batch_size, masks,
                              neighbor_weight, extra_vector, params,
                              dropout=0.0, mxu_dtype=jnp.float32):
    """JAX/Pallas equivalent of GlobalAggregator.forward (eval mode).

    mxu_dtype=jnp.bfloat16 enables the single-pass bf16 MXU fast path on
    v6e/v7x (relative error ~1e-2 vs the f32 reference); default float32
    matches the reference to ~1e-4.
    """
    del masks, dropout  # masks unused by torch forward; dropout = eval identity
    # TODO(synk): training-mode dropout (random mask) is not implemented.
    w1 = params["w_1"].astype(jnp.float32)    # (D+1, D)
    w2 = params["w_2"].astype(jnp.float32)    # (D, 1)
    w3 = params["w_3"].astype(jnp.float32)    # (2D, D)
    D = w2.shape[0]
    out_dtype = self_vectors.dtype

    if extra_vector is None:
        # Mean-pooling branch (cold path) kept in plain JAX glue.
        nvec = jnp.mean(neighbor_vector, axis=2)
        out = jnp.concatenate([self_vectors, nvec], -1) @ w3
        return jnp.maximum(out.reshape(batch_size, -1, D), 0.0).astype(out_dtype)

    B, N, M, _ = neighbor_vector.shape
    R = B * N

    # Free row-major reshapes only: no HBM transpose pass, no dtype up-cast.
    sv = self_vectors.reshape(R, D)
    ev = extra_vector.reshape(R, D)
    nv = neighbor_vector.reshape(R, M * D)          # lane-dense neighbor slab
    nw = neighbor_weight.reshape(R, M)

    TR = _choose_row_tile(R)
    R_pad = _round_up(R, TR)
    if R_pad != R:                                  # zero-pad ragged row counts
        pad = ((0, R_pad - R), (0, 0))
        sv, ev, nv, nw = (jnp.pad(a, pad) for a in (sv, ev, nv, nw))

    # Tiny constant "expander" weights: turn the per-neighbor loop into a few
    # clean lane-dense matmuls (built once, negligible size: <= (M*D)^2 floats).
    w1a, w1b = w1[:D, :], w1[D, :]
    eye_m = jnp.eye(M, dtype=jnp.float32)
    tile_e = jnp.tile(jnp.eye(D, dtype=jnp.float32), (1, M))   # (D, M*D)
    w1bd = jnp.kron(eye_m, w1a)                                # (M*D, M*D)
    w1b_blk = jnp.kron(eye_m, w1b[None, :])                    # (M, M*D)
    w2blk = jnp.kron(eye_m, w2)                                # (M*D, M)
    p_exp = jnp.kron(eye_m, jnp.ones((1, D), jnp.float32))     # (M, M*D)
    w3a = w3[:D, :]                                            # (D, D)
    w3b_rep = jnp.tile(w3[D:, :], (M, 1))                      # (M*D, D) == isum @ w3b
    consts = [tile_e, w1bd, w1b_blk, w2blk, p_exp, w3a, w3b_rep]
    consts = [c.astype(mxu_dtype) for c in consts]

    def row_spec(last):
        return pl.BlockSpec((TR, last), lambda i: (i, 0))

    def full_spec(shape):
        return pl.BlockSpec(shape, lambda i: (0,) * len(shape))

    itemsize = jnp.dtype(out_dtype).itemsize
    cost = pl.CostEstimate(
        flops=2 * R * (M * D * (D + 1) + M * D + 2 * D * D),
        transcendentals=R * M,
        bytes_accessed=R * (3 * D + M * D + M) * itemsize,
    )

    out = pl.pallas_call(
        _make_kernel(mxu_dtype),
        out_shape=jax.ShapeDtypeStruct((R_pad, D), out_dtype),
        grid_spec=pltpu.PrefetchScalarGridSpec(
            num_scalar_prefetch=0,
            grid=(R_pad // TR,),
            in_specs=[
                row_spec(D),                # self
                row_spec(D),                # extra
                row_spec(M * D),            # neighbors (lane-dense)
                row_spec(M),                # neighbor weights
                full_spec((D, M * D)),      # tile_e
                full_spec((M * D, M * D)),  # w1 block-diag
                full_spec((M, M * D)),      # w1 bias-row block
                full_spec((M * D, M)),      # w2 block
                full_spec((M, M * D)),      # p expander
                full_spec((D, D)),          # w3a
                full_spec((M * D, D)),      # w3b (block-sum folded in)
            ],
            out_specs=row_spec(D),
        ),
        compiler_params=pltpu.CompilerParams(
            dimension_semantics=("parallel",),
            # Safe on all generations (v5e/v6e/v7x); worst case at TR=2048,
            # D=32, M=4 is ~10 MiB double-buffered + ~2 MiB constants.
            vmem_limit_bytes=32 * 1024 * 1024,
        ),
        cost_estimate=cost,
    )(sv, ev, nv, nw, *consts)

    return out[:R].reshape(batch_size, -1, D)


def _reference_forward(sv, nv, batch_size, masks, nw, ev, w1, w2, w3):
    """Pure-JAX reference matching the torch forward (eval mode)."""
    del masks
    D = w2.shape[0]
    prod = ev[:, :, None, :] * nv                               # (B,N,M,D)
    cat = jnp.concatenate([prod, nw[..., None]], -1)            # (B,N,M,D+1)
    alpha = jnp.einsum('bnmk,kd->bnmd', cat, w1)
    alpha = jnp.where(alpha > 0, alpha, 0.2 * alpha)            # leaky_relu(0.2)
    alpha = jnp.einsum('bnmd,do->bnmo', alpha, w2)[..., 0]      # (B,N,M)
    alpha = jax.nn.softmax(alpha, axis=-1)[..., None]
    nvec = jnp.sum(alpha * nv, axis=-2)                         # (B,N,D)
    out = jnp.concatenate([sv, nvec], -1) @ w3                  # (B,N,D)
    out = out.reshape(batch_size, -1, D)
    return jnp.maximum(out, 0.0)


if __name__ == "__main__":
    B, N, M, D = 2, 8, 4, 32  # batch, seq, neighbors, hidden dim
    key = jax.random.PRNGKey(0)
    ks = jax.random.split(key, 8)

    # Deterministic parameter init (uniform(-1/sqrt(D), 1/sqrt(D))).
    stdv = 1.0 / jnp.sqrt(jnp.float32(D))
    params = {
        "w_1": jax.random.uniform(ks[0], (D + 1, D), jnp.float32, -stdv, stdv),
        "w_2": jax.random.uniform(ks[1], (D, 1), jnp.float32, -stdv, stdv),
        "w_3": jax.random.uniform(ks[2], (2 * D, D), jnp.float32, -stdv, stdv),
        "bias": jax.random.uniform(ks[3], (D,), jnp.float32, -stdv, stdv),  # unused in forward
    }

    self_vectors = jax.random.normal(ks[4], (B, N, D), jnp.float32)
    neighbor_vector = jax.random.normal(ks[5], (B, N, M, D), jnp.float32)
    neighbor_weight = jax.random.normal(ks[6], (B, N, M), jnp.float32)
    extra_vector = jax.random.normal(ks[7], (B, N, D), jnp.float32)
    masks = jnp.ones((B, N), jnp.float32)  # unused by forward (as in torch)

    out = global_aggregator_forward(self_vectors, neighbor_vector, B, masks,
                                    neighbor_weight, extra_vector, params,
                                    dropout=0.2)
    out = jax.block_until_ready(out)

    ref = _reference_forward(self_vectors, neighbor_vector, B, masks,
                             neighbor_weight, extra_vector,
                             params["w_1"], params["w_2"], params["w_3"])
    ref = jax.block_until_ready(ref)

    assert out.shape == (B, N, D), out.shape
    # 1e-4 tolerance: approx-reciprocal (+1 Newton step) softmax normalization.
    assert jnp.allclose(out, ref, rtol=1e-4, atol=1e-4), \
        float(jnp.max(jnp.abs(out - ref)))

    print("KERNEL_OK")
</pallas_src>

<mosaic_0001>
module attributes {stable_mosaic.version = 11 : i64} {
  func.func @_agg_kernel(%arg0: i32, %arg1: memref<8x32xf32, #tpu.memory_space<vmem>>, %arg2: memref<8x32xf32, #tpu.memory_space<vmem>>, %arg3: memref<8x128xf32, #tpu.memory_space<vmem>>, %arg4: memref<8x4xf32, #tpu.memory_space<vmem>>, %arg5: memref<32x128xf32, #tpu.memory_space<vmem>>, %arg6: memref<128x128xf32, #tpu.memory_space<vmem>>, %arg7: memref<4x128xf32, #tpu.memory_space<vmem>>, %arg8: memref<128x4xf32, #tpu.memory_space<vmem>>, %arg9: memref<4x128xf32, #tpu.memory_space<vmem>>, %arg10: memref<32x32xf32, #tpu.memory_space<vmem>>, %arg11: memref<128x32xf32, #tpu.memory_space<vmem>>, %arg12: memref<8x32xf32, #tpu.memory_space<vmem>>) attributes {dimension_semantics = [#tpu.dimension_semantics<parallel>], iteration_bounds = array<i64: 2>, scalar_prefetch = 0 : i64, scratch_operands = 0 : i64, tpu.core_type = #tpu.core_type<tc>, window_params = [{transform_indices = @transform_0, window_bounds = array<i64: 8, 32>}, {transform_indices = @transform_1, window_bounds = array<i64: 8, 32>}, {transform_indices = @transform_2, window_bounds = array<i64: 8, 128>}, {transform_indices = @transform_3, window_bounds = array<i64: 8, 4>}, {pipeline_mode = #tpu.pipeline_mode<synchronous>, transform_indices = @transform_4, window_bounds = array<i64: 32, 128>}, {pipeline_mode = #tpu.pipeline_mode<synchronous>, transform_indices = @transform_5, window_bounds = array<i64: 128, 128>}, {pipeline_mode = #tpu.pipeline_mode<synchronous>, transform_indices = @transform_6, window_bounds = array<i64: 4, 128>}, {pipeline_mode = #tpu.pipeline_mode<synchronous>, transform_indices = @transform_7, window_bounds = array<i64: 128, 4>}, {pipeline_mode = #tpu.pipeline_mode<synchronous>, transform_indices = @transform_8, window_bounds = array<i64: 4, 128>}, {pipeline_mode = #tpu.pipeline_mode<synchronous>, transform_indices = @transform_9, window_bounds = array<i64: 32, 32>}, {pipeline_mode = #tpu.pipeline_mode<synchronous>, transform_indices = @transform_10, window_bounds = array<i64: 128, 32>}, {transform_indices = @transform_11, window_bounds = array<i64: 8, 32>}]} {
    %c0 = arith.constant 0 : index
    %c0_0 = arith.constant 0 : index
    %0 = vector.load %arg2[%c0, %c0_0] : memref<8x32xf32, #tpu.memory_space<vmem>>, vector<8x32xf32>
    %c0_1 = arith.constant 0 : index
    %c0_2 = arith.constant 0 : index
    %1 = vector.load %arg3[%c0_1, %c0_2] : memref<8x128xf32, #tpu.memory_space<vmem>>, vector<8x128xf32>
    %c0_3 = arith.constant 0 : index
    %c0_4 = arith.constant 0 : index
    %2 = vector.load %arg4[%c0_3, %c0_4] : memref<8x4xf32, #tpu.memory_space<vmem>>, vector<8x4xf32>
    %c0_5 = arith.constant 0 : index
    %c0_6 = arith.constant 0 : index
    %3 = vector.load %arg5[%c0_5, %c0_6] : memref<32x128xf32, #tpu.memory_space<vmem>>, vector<32x128xf32>
    %cst = arith.constant dense<0.000000e+00> : vector<8x128xf32>
    %4 = tpu.matmul %0, %3, %cst {dimension_numbers = #tpu.dot_dimension_numbers<[1], [0], [0], [1], [0, 0, 1, 1], [], []>} : vector<8x32xf32>, vector<32x128xf32>, vector<8x128xf32> -> vector<8x128xf32>
    %5 = arith.mulf %4, %1 : vector<8x128xf32>
    %c0_7 = arith.constant 0 : index
    %c0_8 = arith.constant 0 : index
    %6 = vector.load %arg6[%c0_7, %c0_8] : memref<128x128xf32, #tpu.memory_space<vmem>>, vector<128x128xf32>
    %cst_9 = arith.constant dense<0.000000e+00> : vector<8x128xf32>
    %7 = tpu.matmul %5, %6, %cst_9 {dimension_numbers = #tpu.dot_dimension_numbers<[1], [0], [0], [1], [0, 0, 1, 1], [], []>} : vector<8x128xf32>, vector<128x128xf32>, vector<8x128xf32> -> vector<8x128xf32>
    %c0_10 = arith.constant 0 : index
    %c0_11 = arith.constant 0 : index
    %8 = vector.load %arg7[%c0_10, %c0_11] : memref<4x128xf32, #tpu.memory_space<vmem>>, vector<4x128xf32>
    %cst_12 = arith.constant dense<0.000000e+00> : vector<8x128xf32>
    %9 = tpu.matmul %2, %8, %cst_12 {dimension_numbers = #tpu.dot_dimension_numbers<[1], [0], [0], [1], [0, 0, 1, 1], [], []>} : vector<8x4xf32>, vector<4x128xf32>, vector<8x128xf32> -> vector<8x128xf32>
    %10 = arith.addf %7, %9 : vector<8x128xf32>
    %cst_13 = arith.constant 2.000000e-01 : f32
    %11 = vector.broadcast %cst_13 : f32 to vector<8x128xf32>
    %12 = arith.mulf %11, %10 : vector<8x128xf32>
    %13 = arith.maximumf %10, %12 : vector<8x128xf32>
    %c0_14 = arith.constant 0 : index
    %c0_15 = arith.constant 0 : index
    %14 = vector.load %arg8[%c0_14, %c0_15] : memref<128x4xf32, #tpu.memory_space<vmem>>, vector<128x4xf32>
    %cst_16 = arith.constant dense<0.000000e+00> : vector<8x4xf32>
    %15 = tpu.matmul %13, %14, %cst_16 {dimension_numbers = #tpu.dot_dimension_numbers<[1], [0], [0], [1], [0, 0, 1, 1], [], []>} : vector<8x128xf32>, vector<128x4xf32>, vector<8x4xf32> -> vector<8x4xf32>
    %cst_17 = arith.constant dense<0xFF800000> : vector<8xf32>
    %16 = vector.multi_reduction <maximumf>, %15, %cst_17 [1] : vector<8x4xf32> to vector<8xf32>
    %17 = vector.shape_cast %16 : vector<8xf32> to vector<8x1xf32>
    %18 = vector.broadcast %17 : vector<8x1xf32> to vector<8x4xf32>
    %19 = arith.subf %15, %18 : vector<8x4xf32>
    %20 = math.exp %19 : vector<8x4xf32>
    %cst_18 = arith.constant dense<0.000000e+00> : vector<8xf32>
    %21 = vector.multi_reduction <add>, %20, %cst_18 [1] : vector<8x4xf32> to vector<8xf32>
    %22 = vector.shape_cast %21 : vector<8xf32> to vector<8x1xf32>
    %23 = tpu.reciprocal %22 {approx = true} : vector<8x1xf32> -> vector<8x1xf32>
    %24 = arith.mulf %22, %23 : vector<8x1xf32>
    %cst_19 = arith.constant 2.000000e+00 : f32
    %25 = vector.broadcast %cst_19 : f32 to vector<8x1xf32>
    %26 = arith.subf %25, %24 : vector<8x1xf32>
    %27 = arith.mulf %23, %26 : vector<8x1xf32>
    %28 = vector.broadcast %27 : vector<8x1xf32> to vector<8x4xf32>
    %29 = arith.mulf %20, %28 : vector<8x4xf32>
    %c0_20 = arith.constant 0 : index
    %c0_21 = arith.constant 0 : index
    %30 = vector.load %arg9[%c0_20, %c0_21] : memref<4x128xf32, #tpu.memory_space<vmem>>, vector<4x128xf32>
    %cst_22 = arith.constant dense<0.000000e+00> : vector<8x128xf32>
    %31 = tpu.matmul %29, %30, %cst_22 {dimension_numbers = #tpu.dot_dimension_numbers<[1], [0], [0], [1], [0, 0, 1, 1], [], []>} : vector<8x4xf32>, vector<4x128xf32>, vector<8x128xf32> -> vector<8x128xf32>
    %32 = arith.mulf %31, %1 : vector<8x128xf32>
    %c0_23 = arith.constant 0 : index
    %c0_24 = arith.constant 0 : index
    %33 = vector.load %arg1[%c0_23, %c0_24] : memref<8x32xf32, #tpu.memory_space<vmem>>, vector<8x32xf32>
    %c0_25 = arith.constant 0 : index
    %c0_26 = arith.constant 0 : index
    %34 = vector.load %arg10[%c0_25, %c0_26] : memref<32x32xf32, #tpu.memory_space<vmem>>, vector<32x32xf32>
    %cst_27 = arith.constant dense<0.000000e+00> : vector<8x32xf32>
    %35 = tpu.matmul %33, %34, %cst_27 {dimension_numbers = #tpu.dot_dimension_numbers<[1], [0], [0], [1], [0, 0, 1, 1], [], []>} : vector<8x32xf32>, vector<32x32xf32>, vector<8x32xf32> -> vector<8x32xf32>
    %c0_28 = arith.constant 0 : index
    %c0_29 = arith.constant 0 : index
    %36 = vector.load %arg11[%c0_28, %c0_29] : memref<128x32xf32, #tpu.memory_space<vmem>>, vector<128x32xf32>
    %cst_30 = arith.constant dense<0.000000e+00> : vector<8x32xf32>
    %37 = tpu.matmul %32, %36, %cst_30 {dimension_numbers = #tpu.dot_dimension_numbers<[1], [0], [0], [1], [0, 0, 1, 1], [], []>} : vector<8x128xf32>, vector<128x32xf32>, vector<8x32xf32> -> vector<8x32xf32>
    %38 = arith.addf %35, %37 : vector<8x32xf32>
    %cst_31 = arith.constant 0.000000e+00 : f32
    %39 = vector.broadcast %cst_31 : f32 to vector<8x32xf32>
    %40 = arith.maximumf %38, %39 : vector<8x32xf32>
    %c0_32 = arith.constant 0 : index
    %c0_33 = arith.constant 0 : index
    %41 = vector.load %arg12[%c0_32, %c0_33] : memref<8x32xf32, #tpu.memory_space<vmem>>, vector<8x32xf32>
    tpu.vector_store %arg12[%c0_32, %c0_33], %40 {strides = array<i32>} : memref<8x32xf32, #tpu.memory_space<vmem>>, vector<8x32xf32>,
    return
  }
  func.func @transform_0(%arg0: i32) -> (i32, i32) {
    %c0_i32 = arith.constant 0 : i32
    %c0_i32_0 = arith.constant 0 : i32
    return %arg0, %c0_i32 : i32, i32
  }
  func.func @transform_1(%arg0: i32) -> (i32, i32) {
    %c0_i32 = arith.constant 0 : i32
    %c0_i32_0 = arith.constant 0 : i32
    return %arg0, %c0_i32 : i32, i32
  }
  func.func @transform_2(%arg0: i32) -> (i32, i32) {
    %c0_i32 = arith.constant 0 : i32
    %c0_i32_0 = arith.constant 0 : i32
    return %arg0, %c0_i32 : i32, i32
  }
  func.func @transform_3(%arg0: i32) -> (i32, i32) {
    %c0_i32 = arith.constant 0 : i32
    %c0_i32_0 = arith.constant 0 : i32
    return %arg0, %c0_i32 : i32, i32
  }
  func.func @transform_4(%arg0: i32) -> (i32, i32) {
    %c0_i32 = arith.constant 0 : i32
    %c0_i32_0 = arith.constant 0 : i32
    %c0_i32_1 = arith.constant 0 : i32
    return %c0_i32, %c0_i32_0 : i32, i32
  }
  func.func @transform_5(%arg0: i32) -> (i32, i32) {
    %c0_i32 = arith.constant 0 : i32
    %c0_i32_0 = arith.constant 0 : i32
    %c0_i32_1 = arith.constant 0 : i32
    return %c0_i32, %c0_i32_0 : i32, i32
  }
  func.func @transform_6(%arg0: i32) -> (i32, i32) {
    %c0_i32 = arith.constant 0 : i32
    %c0_i32_0 = arith.constant 0 : i32
    %c0_i32_1 = arith.constant 0 : i32
    return %c0_i32, %c0_i32_0 : i32, i32
  }
  func.func @transform_7(%arg0: i32) -> (i32, i32) {
    %c0_i32 = arith.constant 0 : i32
    %c0_i32_0 = arith.constant 0 : i32
    %c0_i32_1 = arith.constant 0 : i32
    return %c0_i32, %c0_i32_0 : i32, i32
  }
  func.func @transform_8(%arg0: i32) -> (i32, i32) {
    %c0_i32 = arith.constant 0 : i32
    %c0_i32_0 = arith.constant 0 : i32
    %c0_i32_1 = arith.constant 0 : i32
    return %c0_i32, %c0_i32_0 : i32, i32
  }
  func.func @transform_9(%arg0: i32) -> (i32, i32) {
    %c0_i32 = arith.constant 0 : i32
    %c0_i32_0 = arith.constant 0 : i32
    %c0_i32_1 = arith.constant 0 : i32
    return %c0_i32, %c0_i32_0 : i32, i32
  }
  func.func @transform_10(%arg0: i32) -> (i32, i32) {
    %c0_i32 = arith.constant 0 : i32
    %c0_i32_0 = arith.constant 0 : i32
    %c0_i32_1 = arith.constant 0 : i32
    return %c0_i32, %c0_i32_0 : i32, i32
  }
  func.func @transform_11(%arg0: i32) -> (i32, i32) {
    %c0_i32 = arith.constant 0 : i32
    %c0_i32_0 = arith.constant 0 : i32
    return %arg0, %c0_i32 : i32, i32
  }
}

</mosaic_0001>

<llo_original>
// kernel: tpu_custom_call.1
$region0: #{tpu_custom_call.1}
  #allocation0 [shape = 'u32[]', space=smem, size = 0x4, offset = 0x4, fixed_abs, tag = 'smem constant byte address 0x4 - core index']
  #allocation1 [shape = 'u32[144,128]{1,0:T(1,128)}', space=vmem, size = 0x12000, scoped, tag = 'internal scratch']
  %s0 = inlined_call_operand.vmem [shape: f32[16,32], index: 0, kind: input, shape index: {}]
  %s1 = inlined_call_operand.vmem [shape: f32[16,32], index: 1, kind: input, shape index: {}]
  %s2 = inlined_call_operand.vmem [shape: f32[16,128], index: 2, kind: input, shape index: {}]
  %s3 = inlined_call_operand.vmem [shape: f32[16,4], index: 3, kind: input, shape index: {}]
  %s4 = inlined_call_operand.vmem [shape: f32[32,128], index: 4, kind: input, shape index: {}]
  %s5 = inlined_call_operand.vmem [shape: f32[128,128], index: 5, kind: input, shape index: {}]
  %s6 = inlined_call_operand.vmem [shape: f32[4,128], index: 6, kind: input, shape index: {}]
  %s7 = inlined_call_operand.vmem [shape: f32[128,4], index: 7, kind: input, shape index: {}]
  %s8 = inlined_call_operand.vmem [shape: f32[4,128], index: 8, kind: input, shape index: {}]
  %s9 = inlined_call_operand.vmem [shape: f32[32,32], index: 9, kind: input, shape index: {}]
  %s10 = inlined_call_operand.vmem [shape: f32[128,32], index: 10, kind: input, shape index: {}]
  %s11 = inlined_call_operand.hbm [shape: f32[16,32], index: 11, kind: output, shape index: {}]
  %s12 = sld [smem:[#allocation0]]
  $region77: #{tpu_custom_call.1} parent=0
    _
  %s14 = ssub.s32 1, %s12
  %s15 = scalar_select 0, %s14, %s12
  $region1: #{tpu_custom_call.1} parent=0
    #allocation2 [shape = 'u8[8192]{0}', space=vmem, size = 0x2000, scoped, tag = 'output window, operand 0']
    #allocation3 [shape = 's32[2]{0}', space=sflag, size = 0x8, scoped, tag = 'scoped memory for tpu_custom_call.1']
    %16 = vsyncpa [#allocation3], 0
    %s17 = scalar_lea.sflag [#allocation3], 1
    %18 = vsyncpa %s17, 0
    loop: start=0, step=1, limit=4
    $region2: #{tpu_custom_call.1} parent=1 // loop_pre_header
      _
    $region3: #{tpu_custom_call.1} parent=1 // loop_header
      %s20 = sphi 0, %s24
      %p21 = scmp.ge.s32.totalorder %s20, 4
      %s30 = sphi 0, %s32
      %s33 = sphi 0, %s30
      %s34 = sphi 0, %s33
      %s50 = sphi 0, %s34
      %s56 = sphi 0, %s58
      %s59 = sphi 0, %s56
      %s60 = sphi 0, %s59
      %s76 = sphi 0, %s60
      %s82 = sphi 0, %s84
      %s85 = sphi 0, %s82
      %s86 = sphi 0, %s85
      %s102 = sphi 0, %s86
      %s108 = sphi 0, %s110
      %s111 = sphi 0, %s108
      %s112 = sphi 0, %s111
      %s128 = sphi 0, %s112
      %s132 = sphi 0, %s132
      %s134 = sphi 0, %s132
      %s135 = sphi 0, %s134
      %s149 = sphi 0, %s135
      %s153 = sphi 0, %s153
      %s155 = sphi 0, %s153
      %s156 = sphi 0, %s155
      %s170 = sphi 0, %s156
      %s174 = sphi 0, %s174
      %s176 = sphi 0, %s174
      %s177 = sphi 0, %s176
      %s191 = sphi 0, %s177
      %s195 = sphi 0, %s195
      %s197 = sphi 0, %s195
      %s198 = sphi 0, %s197
      %s212 = sphi 0, %s198
      %s216 = sphi 0, %s216
      %s218 = sphi 0, %s216
      %s219 = sphi 0, %s218
      %s233 = sphi 0, %s219
      %s237 = sphi 0, %s237
      %s239 = sphi 0, %s237
      %s240 = sphi 0, %s239
      %s254 = sphi 0, %s240
      %s258 = sphi 0, %s258
      %s260 = sphi 0, %s258
      %s261 = sphi 0, %s260
      %s275 = sphi 0, %s261
      %s281 = sphi 0, %s283
      %s284 = sphi 0, %s281
      %s285 = sphi 0, %s284
      %s301 = sphi 0, %s285
    $region4: #{tpu_custom_call.1} parent=1 // loop_header_branch
      %23 = sbr.rel (%p21) target = $region8
    $region5: #{tpu_custom_call.1} parent=1 // loop_body
      %s25 = ssub.s32 %s20, 1
      %s26 = ssub.s32 %s20, 2
      %s27 = sadd.s32 %s20, 1
      %s28 = ssub.s32 %s20, %s27
      %p29 = scmp.eq.s32.totalorder %s28, 0
      %s31 = sadd.s32 %s30, 1
      %s32 = scalar_select %p29, %s30, %s31
      %p35 = pneg %p29
      %p36 = scmp.eq.s32.totalorder %s20, 1
      %p37 = por %p35, %p36
      %p38 = scmp.ne.s32.totalorder %s30, %s33
      %p39 = scmp.eq.s32.totalorder %s20, 0
      %p40 = por %p38, %p39
      %p41 = scmp.ne.s32.totalorder %s30, %s33
      %p42 = scmp.eq.s32.totalorder %s25, 1
      %p43 = por %p41, %p42
      %p44 = scmp.ne.s32.totalorder %s33, %s34
      %p45 = scmp.eq.s32.totalorder %s25, 0
      %p46 = por %p44, %p45
      %p47 = scmp.ne.s32.totalorder %s33, %s34
      %p48 = scmp.eq.s32.totalorder %s26, 1
      %p49 = por %p47, %p48
      %p51 = scmp.ne.s32.totalorder %s34, %s50
      %p52 = scmp.eq.s32.totalorder %s26, 0
      %p53 = por %p51, %p52
      %s54 = ssub.s32 %s20, %s27
      %p55 = scmp.eq.s32.totalorder %s54, 0
      %s57 = sadd.s32 %s56, 1
      %s58 = scalar_select %p55, %s56, %s57
      %p61 = pneg %p55
      %p62 = scmp.eq.s32.totalorder %s20, 1
      %p63 = por %p61, %p62
      %p64 = scmp.ne.s32.totalorder %s56, %s59
      %p65 = scmp.eq.s32.totalorder %s20, 0
      %p66 = por %p64, %p65
      %p67 = scmp.ne.s32.totalorder %s56, %s59
      %p68 = scmp.eq.s32.totalorder %s25, 1
      %p69 = por %p67, %p68
      %p70 = scmp.ne.s32.totalorder %s59, %s60
      %p71 = scmp.eq.s32.totalorder %s25, 0
      %p72 = por %p70, %p71
      %p73 = scmp.ne.s32.totalorder %s59, %s60
      %p74 = scmp.eq.s32.totalorder %s26, 1
      %p75 = por %p73, %p74
      %p77 = scmp.ne.s32.totalorder %s60, %s76
      %p78 = scmp.eq.s32.totalorder %s26, 0
      %p79 = por %p77, %p78
      %s80 = ssub.s32 %s20, %s27
      %p81 = scmp.eq.s32.totalorder %s80, 0
      %s83 = sadd.s32 %s82, 1
      %s84 = scalar_select %p81, %s82, %s83
      %p87 = pneg %p81
      %p88 = scmp.eq.s32.totalorder %s20, 1
      %p89 = por %p87, %p88
      %p90 = scmp.ne.s32.totalorder %s82, %s85
      %p91 = scmp.eq.s32.totalorder %s20, 0
      %p92 = por %p90, %p91
      %p93 = scmp.ne.s32.totalorder %s82, %s85
      %p94 = scmp.eq.s32.totalorder %s25, 1
      %p95 = por %p93, %p94
      %p96 = scmp.ne.s32.totalorder %s85, %s86
      %p97 = scmp.eq.s32.totalorder %s25, 0
      %p98 = por %p96, %p97
      %p99 = scmp.ne.s32.totalorder %s85, %s86
      %p100 = scmp.eq.s32.totalorder %s26, 1
      %p101 = por %p99, %p100
      %p103 = scmp.ne.s32.totalorder %s86, %s102
      %p104 = scmp.eq.s32.totalorder %s26, 0
      %p105 = por %p103, %p104
      %s106 = ssub.s32 %s20, %s27
      %p107 = scmp.eq.s32.totalorder %s106, 0
      %s109 = sadd.s32 %s108, 1
      %s110 = scalar_select %p107, %s108, %s109
      %p113 = pneg %p107
      %p114 = scmp.eq.s32.totalorder %s20, 1
      %p115 = por %p113, %p114
      %p116 = scmp.ne.s32.totalorder %s108, %s111
      %p117 = scmp.eq.s32.totalorder %s20, 0
      %p118 = por %p116, %p117
      %p119 = scmp.ne.s32.totalorder %s108, %s111
      %p120 = scmp.eq.s32.totalorder %s25, 1
      %p121 = por %p119, %p120
      %p122 = scmp.ne.s32.totalorder %s111, %s112
      %p123 = scmp.eq.s32.totalorder %s25, 0
      %p124 = por %p122, %p123
      %p125 = scmp.ne.s32.totalorder %s111, %s112
      %p126 = scmp.eq.s32.totalorder %s26, 1
      %p127 = por %p125, %p126
      %p129 = scmp.ne.s32.totalorder %s112, %s128
      %p130 = scmp.eq.s32.totalorder %s26, 0
      %p131 = por %p129, %p130
      %s133 = sadd.s32 %s132, 1
      %p136 = scmp.eq.s32.totalorder %s20, 1
      %p137 = scmp.ne.s32.totalorder %s132, %s134
      %p138 = scmp.eq.s32.totalorder %s20, 0
      %p139 = por %p137, %p138
      %p140 = scmp.ne.s32.totalorder %s132, %s134
      %p141 = scmp.eq.s32.totalorder %s25, 1
      %p142 = por %p140, %p141
      %p143 = scmp.ne.s32.totalorder %s134, %s135
      %p144 = scmp.eq.s32.totalorder %s25, 0
      %p145 = por %p143, %p144
      %p146 = scmp.ne.s32.totalorder %s134, %s135
      %p147 = scmp.eq.s32.totalorder %s26, 1
      %p148 = por %p146, %p147
      %p150 = scmp.ne.s32.totalorder %s135, %s149
      %p151 = scmp.eq.s32.totalorder %s26, 0
      %p152 = por %p150, %p151
      %s154 = sadd.s32 %s153, 1
      %p157 = scmp.eq.s32.totalorder %s20, 1
      %p158 = scmp.ne.s32.totalorder %s153, %s155
      %p159 = scmp.eq.s32.totalorder %s20, 0
      %p160 = por %p158, %p159
      %p161 = scmp.ne.s32.totalorder %s153, %s155
      %p162 = scmp.eq.s32.totalorder %s25, 1
      %p163 = por %p161, %p162
      %p164 = scmp.ne.s32.totalorder %s155, %s156
      %p165 = scmp.eq.s32.totalorder %s25, 0
      %p166 = por %p164, %p165
      %p167 = scmp.ne.s32.totalorder %s155, %s156
      %p168 = scmp.eq.s32.totalorder %s26, 1
      %p169 = por %p167, %p168
      %p171 = scmp.ne.s32.totalorder %s156, %s170
      %p172 = scmp.eq.s32.totalorder %s26, 0
      %p173 = por %p171, %p172
      %s175 = sadd.s32 %s174, 1
      %p178 = scmp.eq.s32.totalorder %s20, 1
      %p179 = scmp.ne.s32.totalorder %s174, %s176
      %p180 = scmp.eq.s32.totalorder %s20, 0
      %p181 = por %p179, %p180
      %p182 = scmp.ne.s32.totalorder %s174, %s176
      %p183 = scmp.eq.s32.totalorder %s25, 1
      %p184 = por %p182, %p183
      %p185 = scmp.ne.s32.totalorder %s176, %s177
      %p186 = scmp.eq.s32.totalorder %s25, 0
      %p187 = por %p185, %p186
      %p188 = scmp.ne.s32.totalorder %s176, %s177
      %p189 = scmp.eq.s32.totalorder %s26, 1
      %p190 = por %p188, %p189
      %p192 = scmp.ne.s32.totalorder %s177, %s191
      %p193 = scmp.eq.s32.totalorder %s26, 0
      %p194 = por %p192, %p193
      %s196 = sadd.s32 %s195, 1
      %p199 = scmp.eq.s32.totalorder %s20, 1
      %p200 = scmp.ne.s32.totalorder %s195, %s197
      %p201 = scmp.eq.s32.totalorder %s20, 0
      %p202 = por %p200, %p201
      %p203 = scmp.ne.s32.totalorder %s195, %s197
      %p204 = scmp.eq.s32.totalorder %s25, 1
      %p205 = por %p203, %p204
      %p206 = scmp.ne.s32.totalorder %s197, %s198
      %p207 = scmp.eq.s32.totalorder %s25, 0
      %p208 = por %p206, %p207
      %p209 = scmp.ne.s32.totalorder %s197, %s198
      %p210 = scmp.eq.s32.totalorder %s26, 1
      %p211 = por %p209, %p210
      %p213 = scmp.ne.s32.totalorder %s198, %s212
      %p214 = scmp.eq.s32.totalorder %s26, 0
      %p215 = por %p213, %p214
      %s217 = sadd.s32 %s216, 1
      %p220 = scmp.eq.s32.totalorder %s20, 1
      %p221 = scmp.ne.s32.totalorder %s216, %s218
      %p222 = scmp.eq.s32.totalorder %s20, 0
      %p223 = por %p221, %p222
      %p224 = scmp.ne.s32.totalorder %s216, %s218
      %p225 = scmp.eq.s32.totalorder %s25, 1
      %p226 = por %p224, %p225
      %p227 = scmp.ne.s32.totalorder %s218, %s219
      %p228 = scmp.eq.s32.totalorder %s25, 0
      %p229 = por %p227, %p228
      %p230 = scmp.ne.s32.totalorder %s218, %s219
      %p231 = scmp.eq.s32.totalorder %s26, 1
      %p232 = por %p230, %p231
      %p234 = scmp.ne.s32.totalorder %s219, %s233
      %p235 = scmp.eq.s32.totalorder %s26, 0
      %p236 = por %p234, %p235
      %s238 = sadd.s32 %s237, 1
      %p241 = scmp.eq.s32.totalorder %s20, 1
      %p242 = scmp.ne.s32.totalorder %s237, %s239
      %p243 = scmp.eq.s32.totalorder %s20, 0
      %p244 = por %p242, %p243
      %p245 = scmp.ne.s32.totalorder %s237, %s239
      %p246 = scmp.eq.s32.totalorder %s25, 1
      %p247 = por %p245, %p246
      %p248 = scmp.ne.s32.totalorder %s239, %s240
      %p249 = scmp.eq.s32.totalorder %s25, 0
      %p250 = por %p248, %p249
      %p251 = scmp.ne.s32.totalorder %s239, %s240
      %p252 = scmp.eq.s32.totalorder %s26, 1
      %p253 = por %p251, %p252
      %p255 = scmp.ne.s32.totalorder %s240, %s254
      %p256 = scmp.eq.s32.totalorder %s26, 0
      %p257 = por %p255, %p256
      %s259 = sadd.s32 %s258, 1
      %p262 = scmp.eq.s32.totalorder %s20, 1
      %p263 = scmp.ne.s32.totalorder %s258, %s260
      %p264 = scmp.eq.s32.totalorder %s20, 0
      %p265 = por %p263, %p264
      %p266 = scmp.ne.s32.totalorder %s258, %s260
      %p267 = scmp.eq.s32.totalorder %s25, 1
      %p268 = por %p266, %p267
      %p269 = scmp.ne.s32.totalorder %s260, %s261
      %p270 = scmp.eq.s32.totalorder %s25, 0
      %p271 = por %p269, %p270
      %p272 = scmp.ne.s32.totalorder %s260, %s261
      %p273 = scmp.eq.s32.totalorder %s26, 1
      %p274 = por %p272, %p273
      %p276 = scmp.ne.s32.totalorder %s261, %s275
      %p277 = scmp.eq.s32.totalorder %s26, 0
      %p278 = por %p276, %p277
      %s279 = ssub.s32 %s20, %s27
      %p280 = scmp.eq.s32.totalorder %s279, 0
      %s282 = sadd.s32 %s281, 1
      %s283 = scalar_select %p280, %s281, %s282
      %p286 = pneg %p280
      %p287 = scmp.eq.s32.totalorder %s20, 1
      %p288 = por %p286, %p287
      %p289 = scmp.ne.s32.totalorder %s281, %s284
      %p290 = scmp.eq.s32.totalorder %s20, 0
      %p291 = por %p289, %p290
      %p292 = scmp.ne.s32.totalorder %s281, %s284
      %p293 = scmp.eq.s32.totalorder %s25, 1
      %p294 = por %p292, %p293
      %p295 = scmp.ne.s32.totalorder %s284, %s285
      %p296 = scmp.eq.s32.totalorder %s25, 0
      %p297 = por %p295, %p296
      %p298 = scmp.ne.s32.totalorder %s284, %s285
      %p299 = scmp.eq.s32.totalorder %s26, 1
      %p300 = por %p298, %p299
      %p302 = scmp.ne.s32.totalorder %s285, %s301
      %p303 = scmp.eq.s32.totalorder %s26, 0
      %p304 = por %p302, %p303
      %p305 = scmp.le.s32.totalorder 1, %s20
      %p306 = scmp.lt.s32.totalorder %s20, 3
      %p307 = pnand %p305, %p306
      %p308 = pneg %p307
      // Predicated region
      $region9: #{tpu_custom_call.1} parent=5 // pred_check
        _
      $region10: #{tpu_custom_call.1} parent=5 // pred_check_branch
        %310 = sbr.rel (%p307) target = $region12
      $region11: #{tpu_custom_call.1} parent=5 // pred_region
        %s311 = ssub.s32 %s20, 1
        // Predicated region
        $region13: #{tpu_custom_call.1} parent=11 // pred_check
          %p312 = pneg %p145
        $region14: #{tpu_custom_call.1} parent=11 // pred_check_branch
          %314 = sbr.rel (%p312) target = $region16
        $region15: #{tpu_custom_call.1} parent=11 // pred_region
          _
        $region16: #{tpu_custom_call.1} parent=11 // pred_fallthru
          _
        // Predicated region
        $region17: #{tpu_custom_call.1} parent=11 // pred_check
          %p315 = pneg %p166
        $region18: #{tpu_custom_call.1} parent=11 // pred_check_branch
          %317 = sbr.rel (%p315) target = $region20
        $region19: #{tpu_custom_call.1} parent=11 // pred_region
          _
        $region20: #{tpu_custom_call.1} parent=11 // pred_fallthru
          _
        // Predicated region
        $region21: #{tpu_custom_call.1} parent=11 // pred_check
          %p318 = pneg %p187
        $region22: #{tpu_custom_call.1} parent=11 // pred_check_branch
          %320 = sbr.rel (%p318) target = $region24
        $region23: #{tpu_custom_call.1} parent=11 // pred_region
          _
        $region24: #{tpu_custom_call.1} parent=11 // pred_fallthru
          _
        // Predicated region
        $region25: #{tpu_custom_call.1} parent=11 // pred_check
          %p321 = pneg %p208
        $region26: #{tpu_custom_call.1} parent=11 // pred_check_branch
          %323 = sbr.rel (%p321) target = $region28
        $region27: #{tpu_custom_call.1} parent=11 // pred_region
          _
        $region28: #{tpu_custom_call.1} parent=11 // pred_fallthru
          _
        // Predicated region
        $region29: #{tpu_custom_call.1} parent=11 // pred_check
          %p324 = pneg %p229
        $region30: #{tpu_custom_call.1} parent=11 // pred_check_branch
          %326 = sbr.rel (%p324) target = $region32
        $region31: #{tpu_custom_call.1} parent=11 // pred_region
          _
        $region32: #{tpu_custom_call.1} parent=11 // pred_fallthru
          _
        // Predicated region
        $region33: #{tpu_custom_call.1} parent=11 // pred_check
          %p327 = pneg %p250
        $region34: #{tpu_custom_call.1} parent=11 // pred_check_branch
          %329 = sbr.rel (%p327) target = $region36
        $region35: #{tpu_custom_call.1} parent=11 // pred_region
          _
        $region36: #{tpu_custom_call.1} parent=11 // pred_fallthru
          _
        // Predicated region
        $region37: #{tpu_custom_call.1} parent=11 // pred_check
          %p330 = pneg %p271
        $region38: #{tpu_custom_call.1} parent=11 // pred_check_branch
          %332 = sbr.rel (%p330) target = $region40
        $region39: #{tpu_custom_call.1} parent=11 // pred_region
          _
        $region40: #{tpu_custom_call.1} parent=11 // pred_fallthru
          _
      $region12: #{tpu_custom_call.1} parent=5 // pred_fallthru
        _
      %p333 = scmp.lt.s32.totalorder %s20, 2
      // Predicated region
      $region41: #{tpu_custom_call.1} parent=5 // pred_check
        %p334 = pneg %p333
      $region42: #{tpu_custom_call.1} parent=5 // pred_check_branch
        %336 = sbr.rel (%p334) target = $region44
      $region43: #{tpu_custom_call.1} parent=5 // pred_region
        // Predicated region
        $region45: #{tpu_custom_call.1} parent=43 // pred_check
          %p337 = pneg %p40
        $region46: #{tpu_custom_call.1} parent=43 // pred_check_branch
          %339 = sbr.rel (%p337) target = $region48
        $region47: #{tpu_custom_call.1} parent=43 // pred_region
          %p340 = scmp.lt.s32.totalorder %s20, 1
          %s341 = scalar_select %p340, %s20, 1
          %s342 = smul.addr %s341, 8
          %s343 = scalar_lea.vmem %s0, %s342
        $region48: #{tpu_custom_call.1} parent=43 // pred_fallthru
          _
        // Predicated region
        $region49: #{tpu_custom_call.1} parent=43 // pred_check
          %p344 = pneg %p66
        $region50: #{tpu_custom_call.1} parent=43 // pred_check_branch
          %346 = sbr.rel (%p344) target = $region52
        $region51: #{tpu_custom_call.1} parent=43 // pred_region
          %p347 = scmp.lt.s32.totalorder %s20, 1
          %s348 = scalar_select %p347, %s20, 1
          %s349 = smul.addr %s348, 8
          %s350 = scalar_lea.vmem %s1, %s349
        $region52: #{tpu_custom_call.1} parent=43 // pred_fallthru
          _
        // Predicated region
        $region53: #{tpu_custom_call.1} parent=43 // pred_check
          %p351 = pneg %p92
        $region54: #{tpu_custom_call.1} parent=43 // pred_check_branch
          %353 = sbr.rel (%p351) target = $region56
        $region55: #{tpu_custom_call.1} parent=43 // pred_region
          %p354 = scmp.lt.s32.totalorder %s20, 1
          %s355 = scalar_select %p354, %s20, 1
          %s356 = smul.addr %s355, 8
          %s357 = scalar_lea.vmem %s2, %s356
        $region56: #{tpu_custom_call.1} parent=43 // pred_fallthru
          _
        // Predicated region
        $region57: #{tpu_custom_call.1} parent=43 // pred_check
          %p358 = pneg %p118
        $region58: #{tpu_custom_call.1} parent=43 // pred_check_branch
          %360 = sbr.rel (%p358) target = $region60
        $region59: #{tpu_custom_call.1} parent=43 // pred_region
          %p361 = scmp.lt.s32.totalorder %s20, 1
          %s362 = scalar_select %p361, %s20, 1
          %s363 = smul.addr %s362, 8
          %s364 = scalar_lea.vmem %s3, %s363
        $region60: #{tpu_custom_call.1} parent=43 // pred_fallthru
          _
      $region44: #{tpu_custom_call.1} parent=5 // pred_fallthru
        _
      %p365 = scmp.le.s32.totalorder 1, %s20
      %p366 = scmp.lt.s32.totalorder %s20, 3
      %p367 = pnand %p365, %p366
      %p368 = pneg %p367
      // Predicated region
      $region61: #{tpu_custom_call.1} parent=5 // pred_check
        _
      $region62: #{tpu_custom_call.1} parent=5 // pred_check_branch
        %370 = sbr.rel (%p367) target = $region64
      $region63: #{tpu_custom_call.1} parent=5 // pred_region
        %s371 = ssub.s32 %s20, 1
        %p372 = scmp.lt.s32.totalorder %s25, 1
        %s373 = scalar_select %p372, %s25, 1
        %s374 = smul.addr %s373, 8
        %s375 = scalar_lea.vmem %s0, %s374
        %p376 = pneg %p46
        %p377 = pneg %p43
        %p378 = scmp.lt.s32.totalorder %s25, 1
        %s379 = scalar_select %p378, %s25, 1
        %s380 = smul.addr %s379, 8
        %s381 = scalar_lea.vmem %s1, %s380
        %p382 = pneg %p72
        %p383 = pneg %p69
        %p384 = scmp.lt.s32.totalorder %s25, 1
        %s385 = scalar_select %p384, %s25, 1
        %s386 = smul.addr %s385, 8
        %s387 = scalar_lea.vmem %s2, %s386
        %p388 = pneg %p98
        %p389 = pneg %p95
        %p390 = scmp.lt.s32.totalorder %s25, 1
        %s391 = scalar_select %p390, %s25, 1
        %s392 = smul.addr %s391, 8
        %s393 = scalar_lea.vmem %s3, %s392
        %p394 = pneg %p124
        %p395 = pneg %p121
        %p396 = pneg %p145
        %p397 = pneg %p142
        %p398 = pneg %p166
        %p399 = pneg %p163
        %p400 = pneg %p187
        %p401 = pneg %p184
        %p402 = pneg %p208
        %p403 = pneg %p205
        %p404 = pneg %p229
        %p405 = pneg %p226
        %p406 = pneg %p250
        %p407 = pneg %p247
        %p408 = pneg %p271
        %p409 = pneg %p268
        %p410 = pneg %p297
        %p411 = pneg %p294
        %s412 = sand.u32 %s284, 1
        %s413 = scalar_lea.sflag [#allocation3], %s412
        %s414 = sand.u32 %s284, 1
        %s415 = smul.addr %s414, 8
        %s416 = scalar_lea.vmem [#allocation2], %s415
        %p417 = scmp.lt.s32.totalorder %s25, 1
        %s418 = scalar_select %p417, %s25, 1
        %s419 = smul.addr %s418, 8
        %s420 = scalar_lea.vmem %s0, %s419
        %p421 = scmp.lt.s32.totalorder %s25, 1
        %s422 = scalar_select %p421, %s25, 1
        %s423 = smul.addr %s422, 8
        %s424 = scalar_lea.vmem %s1, %s423
        %p425 = scmp.lt.s32.totalorder %s25, 1
        %s426 = scalar_select %p425, %s25, 1
        %s427 = smul.addr %s426, 8
        %s428 = scalar_lea.vmem %s2, %s427
        %p429 = scmp.lt.s32.totalorder %s25, 1
        %s430 = scalar_select %p429, %s25, 1
        %s431 = smul.addr %s430, 8
        %s432 = scalar_lea.vmem %s3, %s431
        %v433 = vld [vmem:[%s424] sm:$0xff]
        %v434 = vld [vmem:[%s428] sm:$0xff]
        %v435 = vld [vmem:[%s432] sm:$0xff]
        %v436 = vld [vmem:[%s4] sm:$0xff]
        %v437 = vld [vmem:[%s4 + $0x8] sm:$0xff]
        %v438 = vld [vmem:[%s4 + $0x10] sm:$0xff]
        %v439 = vld [vmem:[%s4 + $0x18] sm:$0xff]
        %vm440 = vcmask 261120
        %v442 = vsel %vm440, %v433, 0
        %444 = vmatprep.subr.mxu0 0.0
        %445 = vmatpush1.msra.mxu0 0.0
        %446 = vmatprep.subr.mxu0 0.0
        %447 = vmatpush1.msra.mxu0 0.0
        %448 = vmatprep.subr.mxu0 0.0
        %449 = vmatpush1.msra.mxu0 0.0
        %450 = vmatprep.subr.mxu0 0.0
        %451 = vmatpush1.msra.mxu0 0.0
        %452 = vmatprep.subr.mxu0 0.0
        %453 = vmatpush1.msra.mxu0 0.0
        %454 = vmatprep.subr.mxu0 0.0
        %455 = vmatpush1.msra.mxu0 0.0
        %456 = vmatprep.subr.mxu0 0.0
        %457 = vmatpush1.msra.mxu0 0.0
        %458 = vmatprep.subr.mxu0 0.0
        %459 = vmatpush1.msra.mxu0 0.0
        %460 = vmatprep.subr.mxu0 0.0
        %461 = vmatpush1.msra.mxu0 0.0
        %462 = vmatprep.subr.mxu0 0.0
        %463 = vmatpush1.msra.mxu0 0.0
        %464 = vmatprep.subr.mxu0 0.0
        %465 = vmatpush1.msra.mxu0 0.0
        %466 = vmatprep.subr.mxu0 0.0
        %467 = vmatpush1.msra.mxu0 0.0
        %468 = vmatprep.subr.mxu0 0.0
        %469 = vmatpush1.msra.mxu0 %v439
        %470 = vmatprep.subr.mxu0 0.0
        %471 = vmatpush1.msra.mxu0 %v438
        %472 = vmatprep.subr.mxu0 0.0
        %473 = vmatpush1.msra.mxu0 %v437
        %474 = vmatprep.subr.mxu0 0.0
        %475 = vmatpush1.msra.mxu0 %v436
        %476 = vmatprep.subr.mxu0 0.0
        %477 = vmatpush2.msra.mxu0 0.0
        %478 = vmatprep.subr.mxu0 0.0
        %479 = vmatpush2.msra.mxu0 0.0
        %480 = vmatprep.subr.mxu0 0.0
        %481 = vmatpush2.msra.mxu0 0.0
        %482 = vmatprep.subr.mxu0 0.0
        %483 = vmatpush2.msra.mxu0 0.0
        %484 = vmatprep.subr.mxu0 0.0
        %485 = vmatpush2.msra.mxu0 0.0
        %486 = vmatprep.subr.mxu0 0.0
        %487 = vmatpush2.msra.mxu0 0.0
        %488 = vmatprep.subr.mxu0 0.0
        %489 = vmatpush2.msra.mxu0 0.0
        %490 = vmatprep.subr.mxu0 0.0
        %491 = vmatpush2.msra.mxu0 0.0
        %492 = vmatprep.subr.mxu0 0.0
        %493 = vmatpush2.msra.mxu0 0.0
        %494 = vmatprep.subr.mxu0 0.0
        %495 = vmatpush2.msra.mxu0 0.0
        %496 = vmatprep.subr.mxu0 0.0
        %497 = vmatpush2.msra.mxu0 0.0
        %498 = vmatprep.subr.mxu0 0.0
        %499 = vmatpush2.msra.mxu0 0.0
        %500 = vmatprep.subr.mxu0 0.0
        %501 = vmatpush2.msra.mxu0 0.0
        %502 = vmatprep.subr.mxu0 0.0
        %503 = vmatpush2.msra.mxu0 0.0
        %504 = vmatprep.subr.mxu0 0.0
        %505 = vmatpush2.msra.mxu0 0.0
        %506 = vmatprep.subr.mxu0 0.0
        %507 = vmatpush2.msra.mxu0 0.0
        %508 = vmatprep.mubr.f32.mxu0 0.0
        %509 = vmatmul.mubr.f32.gmra.mxu0 %v442
        %v510 = vpop.f32.mrf.mxu0
        %v511 = vadd.f32 0.0, %v510
        %v512 = vpop.f32.mrf.mxu0
        %513 = vdwg.mxu0
        %v514 = vmul.f32 %v511, %v434
        %v515 = vld [vmem:[%s5] sm:$0xff]
        %v516 = vld [vmem:[%s5 + $0x8] sm:$0xff]
        %v517 = vld [vmem:[%s5 + $0x10] sm:$0xff]
        %v518 = vld [vmem:[%s5 + $0x18] sm:$0xff]
        %v519 = vld [vmem:[%s5 + $0x20] sm:$0xff]
        %v520 = vld [vmem:[%s5 + $0x28] sm:$0xff]
        %v521 = vld [vmem:[%s5 + $0x30] sm:$0xff]
        %v522 = vld [vmem:[%s5 + $0x38] sm:$0xff]
        %v523 = vld [vmem:[%s5 + $0x40] sm:$0xff]
        %v524 = vld [vmem:[%s5 + $0x48] sm:$0xff]
        %v525 = vld [vmem:[%s5 + $0x50] sm:$0xff]
        %v526 = vld [vmem:[%s5 + $0x58] sm:$0xff]
        %v527 = vld [vmem:[%s5 + $0x60] sm:$0xff]
        %v528 = vld [vmem:[%s5 + $0x68] sm:$0xff]
        %v529 = vld [vmem:[%s5 + $0x70] sm:$0xff]
        %v530 = vld [vmem:[%s5 + $0x78] sm:$0xff]
        %v531 = vld [vmem:[%s6] sm:$0xf]
        %vm532 = vcmask 31744
        %v534 = vsel %vm532, %v435, 0
        %vm536 = vcmask 1043456
        %v538 = vsel %vm536, %v531, 0
        %540 = vmatprep.subr.mxu0 0.0
        %541 = vmatpush1.msra.mxu0 0.0
        %542 = vmatprep.subr.mxu0 0.0
        %543 = vmatpush1.msra.mxu0 0.0
        %544 = vmatprep.subr.mxu0 0.0
        %545 = vmatpush1.msra.mxu0 0.0
        %546 = vmatprep.subr.mxu0 0.0
        %547 = vmatpush1.msra.mxu0 0.0
        %548 = vmatprep.subr.mxu0 0.0
        %549 = vmatpush1.msra.mxu0 0.0
        %550 = vmatprep.subr.mxu0 0.0
        %551 = vmatpush1.msra.mxu0 0.0
        %552 = vmatprep.subr.mxu0 0.0
        %553 = vmatpush1.msra.mxu0 0.0
        %554 = vmatprep.subr.mxu0 0.0
        %555 = vmatpush1.msra.mxu0 0.0
        %556 = vmatprep.subr.mxu0 0.0
        %557 = vmatpush1.msra.mxu0 0.0
        %558 = vmatprep.subr.mxu0 0.0
        %559 = vmatpush1.msra.mxu0 0.0
        %560 = vmatprep.subr.mxu0 0.0
        %561 = vmatpush1.msra.mxu0 0.0
        %562 = vmatprep.subr.mxu0 0.0
        %563 = vmatpush1.msra.mxu0 0.0
        %564 = vmatprep.subr.mxu0 0.0
        %565 = vmatpush1.msra.mxu0 0.0
        %566 = vmatprep.subr.mxu0 0.0
        %567 = vmatpush1.msra.mxu0 0.0
        %568 = vmatprep.subr.mxu0 0.0
        %569 = vmatpush1.msra.mxu0 0.0
        %570 = vmatprep.subr.mxu0 0.0
        %571 = vmatpush1.msra.mxu0 %v538
        %572 = vmatprep.subr.mxu0 0.0
        %573 = vmatpush2.msra.mxu0 0.0
        %574 = vmatprep.subr.mxu0 0.0
        %575 = vmatpush2.msra.mxu0 0.0
        %576 = vmatprep.subr.mxu0 0.0
        %577 = vmatpush2.msra.mxu0 0.0
        %578 = vmatprep.subr.mxu0 0.0
        %579 = vmatpush2.msra.mxu0 0.0
        %580 = vmatprep.subr.mxu0 0.0
        %581 = vmatpush2.msra.mxu0 0.0
        %582 = vmatprep.subr.mxu0 0.0
        %583 = vmatpush2.msra.mxu0 0.0
        %584 = vmatprep.subr.mxu0 0.0
        %585 = vmatpush2.msra.mxu0 0.0
        %586 = vmatprep.subr.mxu0 0.0
        %587 = vmatpush2.msra.mxu0 0.0
        %588 = vmatprep.subr.mxu0 0.0
        %589 = vmatpush2.msra.mxu0 0.0
        %590 = vmatprep.subr.mxu0 0.0
        %591 = vmatpush2.msra.mxu0 0.0
        %592 = vmatprep.subr.mxu0 0.0
        %593 = vmatpush2.msra.mxu0 0.0
        %594 = vmatprep.subr.mxu0 0.0
        %595 = vmatpush2.msra.mxu0 0.0
        %596 = vmatprep.subr.mxu0 0.0
        %597 = vmatpush2.msra.mxu0 0.0
        %598 = vmatprep.subr.mxu0 0.0
        %599 = vmatpush2.msra.mxu0 0.0
        %600 = vmatprep.subr.mxu0 0.0
        %601 = vmatpush2.msra.mxu0 0.0
        %602 = vmatprep.subr.mxu0 0.0
        %603 = vmatpush2.msra.mxu0 0.0
        %604 = vmatprep.mubr.f32.mxu0 0.0
        %605 = vmatmul.mubr.f32.gmra.mxu0 %v534
        %v606 = vpop.f32.mrf.mxu0
        %v607 = vadd.f32 0.0, %v606
        %v608 = vpop.f32.mrf.mxu0
        %609 = vdwg.mxu0
        %610 = vmatprep.subr.mxu0 0.0
        %611 = vmatpush1.msra.mxu0 %v530
        %612 = vmatprep.subr.mxu0 0.0
        %613 = vmatpush1.msra.mxu0 %v529
        %614 = vmatprep.subr.mxu0 0.0
        %615 = vmatpush1.msra.mxu0 %v528
        %616 = vmatprep.subr.mxu0 0.0
        %617 = vmatpush1.msra.mxu0 %v527
        %618 = vmatprep.subr.mxu0 0.0
        %619 = vmatpush1.msra.mxu0 %v526
        %620 = vmatprep.subr.mxu0 0.0
        %621 = vmatpush1.msra.mxu0 %v525
        %622 = vmatprep.subr.mxu0 0.0
        %623 = vmatpush1.msra.mxu0 %v524
        %624 = vmatprep.subr.mxu0 0.0
        %625 = vmatpush1.msra.mxu0 %v523
        %626 = vmatprep.subr.mxu0 0.0
        %627 = vmatpush1.msra.mxu0 %v522
        %628 = vmatprep.subr.mxu0 0.0
        %629 = vmatpush1.msra.mxu0 %v521
        %630 = vmatprep.subr.mxu0 0.0
        %631 = vmatpush1.msra.mxu0 %v520
        %632 = vmatprep.subr.mxu0 0.0
        %633 = vmatpush1.msra.mxu0 %v519
        %634 = vmatprep.subr.mxu0 0.0
        %635 = vmatpush1.msra.mxu0 %v518
        %636 = vmatprep.subr.mxu0 0.0
        %637 = vmatpush1.msra.mxu0 %v517
        %638 = vmatprep.subr.mxu0 0.0
        %639 = vmatpush1.msra.mxu0 %v516
        %640 = vmatprep.subr.mxu0 0.0
        %641 = vmatpush1.msra.mxu0 %v515
        %642 = vmatprep.subr.mxu0 0.0
        %643 = vmatpush2.msra.mxu0 0.0
        %644 = vmatprep.subr.mxu0 0.0
        %645 = vmatpush2.msra.mxu0 0.0
        %646 = vmatprep.subr.mxu0 0.0
        %647 = vmatpush2.msra.mxu0 0.0
        %648 = vmatprep.subr.mxu0 0.0
        %649 = vmatpush2.msra.mxu0 0.0
        %650 = vmatprep.subr.mxu0 0.0
        %651 = vmatpush2.msra.mxu0 0.0
        %652 = vmatprep.subr.mxu0 0.0
        %653 = vmatpush2.msra.mxu0 0.0
        %654 = vmatprep.subr.mxu0 0.0
        %655 = vmatpush2.msra.mxu0 0.0
        %656 = vmatprep.subr.mxu0 0.0
        %657 = vmatpush2.msra.mxu0 0.0
        %658 = vmatprep.subr.mxu0 0.0
        %659 = vmatpush2.msra.mxu0 0.0
        %660 = vmatprep.subr.mxu0 0.0
        %661 = vmatpush2.msra.mxu0 0.0
        %662 = vmatprep.subr.mxu0 0.0
        %663 = vmatpush2.msra.mxu0 0.0
        %664 = vmatprep.subr.mxu0 0.0
        %665 = vmatpush2.msra.mxu0 0.0
        %666 = vmatprep.subr.mxu0 0.0
        %667 = vmatpush2.msra.mxu0 0.0
        %668 = vmatprep.subr.mxu0 0.0
        %669 = vmatpush2.msra.mxu0 0.0
        %670 = vmatprep.subr.mxu0 0.0
        %671 = vmatpush2.msra.mxu0 0.0
        %672 = vmatprep.subr.mxu0 0.0
        %673 = vmatpush2.msra.mxu0 0.0
        %674 = vmatprep.mubr.f32.mxu0 0.0
        %675 = vmatmul.mubr.f32.gmra.mxu0 %v514
        %v676 = vpop.f32.mrf.mxu0
        %v677 = vadd.f32 %v607, %v676
        %v678 = vpop.f32.mrf.mxu0
        %679 = vdwg.mxu0
        %v680 = vmul.f32 %v677, 0.2
        %v681 = vmax.f32 %v677, %v680
        %v682 = vld [vmem:[%s7] sm:$0xff]
        %v683 = vld [vmem:[%s7 + $0x8] sm:$0xff]
        %v684 = vld [vmem:[%s7 + $0x10] sm:$0xff]
        %v685 = vld [vmem:[%s7 + $0x18] sm:$0xff]
        %v686 = vld [vmem:[%s7 + $0x20] sm:$0xff]
        %v687 = vld [vmem:[%s7 + $0x28] sm:$0xff]
        %v688 = vld [vmem:[%s7 + $0x30] sm:$0xff]
        %v689 = vld [vmem:[%s7 + $0x38] sm:$0xff]
        %v690 = vld [vmem:[%s7 + $0x40] sm:$0xff]
        %v691 = vld [vmem:[%s7 + $0x48] sm:$0xff]
        %v692 = vld [vmem:[%s7 + $0x50] sm:$0xff]
        %v693 = vld [vmem:[%s7 + $0x58] sm:$0xff]
        %v694 = vld [vmem:[%s7 + $0x60] sm:$0xff]
        %v695 = vld [vmem:[%s7 + $0x68] sm:$0xff]
        %v696 = vld [vmem:[%s7 + $0x70] sm:$0xff]
        %v697 = vld [vmem:[%s7 + $0x78] sm:$0xff]
        %698 = vmatprep.subr.mxu0 0.0
        %699 = vmatpush1.msra.mxu0 %v697
        %700 = vmatprep.subr.mxu0 0.0
        %701 = vmatpush1.msra.mxu0 %v696
        %702 = vmatprep.subr.mxu0 0.0
        %703 = vmatpush1.msra.mxu0 %v695
        %704 = vmatprep.subr.mxu0 0.0
        %705 = vmatpush1.msra.mxu0 %v694
        %706 = vmatprep.subr.mxu0 0.0
        %707 = vmatpush1.msra.mxu0 %v693
        %708 = vmatprep.subr.mxu0 0.0
        %709 = vmatpush1.msra.mxu0 %v692
        %710 = vmatprep.subr.mxu0 0.0
        %711 = vmatpush1.msra.mxu0 %v691
        %712 = vmatprep.subr.mxu0 0.0
        %713 = vmatpush1.msra.mxu0 %v690
        %714 = vmatprep.subr.mxu0 0.0
        %715 = vmatpush1.msra.mxu0 %v689
        %716 = vmatprep.subr.mxu0 0.0
        %717 = vmatpush1.msra.mxu0 %v688
        %718 = vmatprep.subr.mxu0 0.0
        %719 = vmatpush1.msra.mxu0 %v687
        %720 = vmatprep.subr.mxu0 0.0
        %721 = vmatpush1.msra.mxu0 %v686
        %722 = vmatprep.subr.mxu0 0.0
        %723 = vmatpush1.msra.mxu0 %v685
        %724 = vmatprep.subr.mxu0 0.0
        %725 = vmatpush1.msra.mxu0 %v684
        %726 = vmatprep.subr.mxu0 0.0
        %727 = vmatpush1.msra.mxu0 %v683
        %728 = vmatprep.subr.mxu0 0.0
        %729 = vmatpush1.msra.mxu0 %v682
        %730 = vmatprep.subr.mxu0 0.0
        %731 = vmatpush2.msra.mxu0 0.0
        %732 = vmatprep.subr.mxu0 0.0
        %733 = vmatpush2.msra.mxu0 0.0
        %734 = vmatprep.subr.mxu0 0.0
        %735 = vmatpush2.msra.mxu0 0.0
        %736 = vmatprep.subr.mxu0 0.0
        %737 = vmatpush2.msra.mxu0 0.0
        %738 = vmatprep.subr.mxu0 0.0
        %739 = vmatpush2.msra.mxu0 0.0
        %740 = vmatprep.subr.mxu0 0.0
        %741 = vmatpush2.msra.mxu0 0.0
        %742 = vmatprep.subr.mxu0 0.0
        %743 = vmatpush2.msra.mxu0 0.0
        %744 = vmatprep.subr.mxu0 0.0
        %745 = vmatpush2.msra.mxu0 0.0
        %746 = vmatprep.subr.mxu0 0.0
        %747 = vmatpush2.msra.mxu0 0.0
        %748 = vmatprep.subr.mxu0 0.0
        %749 = vmatpush2.msra.mxu0 0.0
        %750 = vmatprep.subr.mxu0 0.0
        %751 = vmatpush2.msra.mxu0 0.0
        %752 = vmatprep.subr.mxu0 0.0
        %753 = vmatpush2.msra.mxu0 0.0
        %754 = vmatprep.subr.mxu0 0.0
        %755 = vmatpush2.msra.mxu0 0.0
        %756 = vmatprep.subr.mxu0 0.0
        %757 = vmatpush2.msra.mxu0 0.0
        %758 = vmatprep.subr.mxu0 0.0
        %759 = vmatpush2.msra.mxu0 0.0
        %760 = vmatprep.subr.mxu0 0.0
        %761 = vmatpush2.msra.mxu0 0.0
        %762 = vmatprep.mubr.f32.mxu0 0.0
        %763 = vmatmul.mubr.f32.gmra.mxu0 %v681
        %v764 = vpop.f32.mrf.mxu0
        %v765 = vadd.f32 0.0, %v764
        %v766 = vpop.f32.mrf.mxu0
        %767 = vdwg.mxu0
        %v768 = vsel %vm532, %v765, -inf
        %769 = vmax.xlane.f32.xlu0 %v768
        %v770 = vpop.xlane.xlu0 %769
        %v771 = vsub.f32 %v765, %v770
        %v772 = vmul.f32 %v771, 1.442695
        %v773 = vpow.pop %v772
        %v774 = vsel %vm532, %v773, 0.0
        %775 = vadd.xlane.f32.xlu0 %v774
        %v776 = vpop.xlane.xlu0 %775
        %v777 = vrcp.pop %v776
        %v778 = vmul.f32 %v776, %v777
        %v779 = vsub.f32 2.0, %v778
        %v780 = vmul.f32 %v777, %v779
        %v781 = vmul.f32 %v773, %v780
        %v782 = vld [vmem:[%s8] sm:$0xf]
        %v784 = vsel %vm532, %v781, 0
        %v787 = vsel %vm536, %v782, 0
        %789 = vmatprep.subr.mxu0 0.0
        %790 = vmatpush1.msra.mxu0 0.0
        %791 = vmatprep.subr.mxu0 0.0
        %792 = vmatpush1.msra.mxu0 0.0
        %793 = vmatprep.subr.mxu0 0.0
        %794 = vmatpush1.msra.mxu0 0.0
        %795 = vmatprep.subr.mxu0 0.0
        %796 = vmatpush1.msra.mxu0 0.0
        %797 = vmatprep.subr.mxu0 0.0
        %798 = vmatpush1.msra.mxu0 0.0
        %799 = vmatprep.subr.mxu0 0.0
        %800 = vmatpush1.msra.mxu0 0.0
        %801 = vmatprep.subr.mxu0 0.0
        %802 = vmatpush1.msra.mxu0 0.0
        %803 = vmatprep.subr.mxu0 0.0
        %804 = vmatpush1.msra.mxu0 0.0
        %805 = vmatprep.subr.mxu0 0.0
        %806 = vmatpush1.msra.mxu0 0.0
        %807 = vmatprep.subr.mxu0 0.0
        %808 = vmatpush1.msra.mxu0 0.0
        %809 = vmatprep.subr.mxu0 0.0
        %810 = vmatpush1.msra.mxu0 0.0
        %811 = vmatprep.subr.mxu0 0.0
        %812 = vmatpush1.msra.mxu0 0.0
        %813 = vmatprep.subr.mxu0 0.0
        %814 = vmatpush1.msra.mxu0 0.0
        %815 = vmatprep.subr.mxu0 0.0
        %816 = vmatpush1.msra.mxu0 0.0
        %817 = vmatprep.subr.mxu0 0.0
        %818 = vmatpush1.msra.mxu0 0.0
        %819 = vmatprep.subr.mxu0 0.0
        %820 = vmatpush1.msra.mxu0 %v787
        %821 = vmatprep.subr.mxu0 0.0
        %822 = vmatpush2.msra.mxu0 0.0
        %823 = vmatprep.subr.mxu0 0.0
        %824 = vmatpush2.msra.mxu0 0.0
        %825 = vmatprep.subr.mxu0 0.0
        %826 = vmatpush2.msra.mxu0 0.0
        %827 = vmatprep.subr.mxu0 0.0
        %828 = vmatpush2.msra.mxu0 0.0
        %829 = vmatprep.subr.mxu0 0.0
        %830 = vmatpush2.msra.mxu0 0.0
        %831 = vmatprep.subr.mxu0 0.0
        %832 = vmatpush2.msra.mxu0 0.0
        %833 = vmatprep.subr.mxu0 0.0
        %834 = vmatpush2.msra.mxu0 0.0
        %835 = vmatprep.subr.mxu0 0.0
        %836 = vmatpush2.msra.mxu0 0.0
        %837 = vmatprep.subr.mxu0 0.0
        %838 = vmatpush2.msra.mxu0 0.0
        %839 = vmatprep.subr.mxu0 0.0
        %840 = vmatpush2.msra.mxu0 0.0
        %841 = vmatprep.subr.mxu0 0.0
        %842 = vmatpush2.msra.mxu0 0.0
        %843 = vmatprep.subr.mxu0 0.0
        %844 = vmatpush2.msra.mxu0 0.0
        %845 = vmatprep.subr.mxu0 0.0
        %846 = vmatpush2.msra.mxu0 0.0
        %847 = vmatprep.subr.mxu0 0.0
        %848 = vmatpush2.msra.mxu0 0.0
        %849 = vmatprep.subr.mxu0 0.0
        %850 = vmatpush2.msra.mxu0 0.0
        %851 = vmatprep.subr.mxu0 0.0
        %852 = vmatpush2.msra.mxu0 0.0
        %853 = vmatprep.mubr.f32.mxu0 0.0
        %854 = vmatmul.mubr.f32.gmra.mxu0 %v784
        %v855 = vpop.f32.mrf.mxu0
        %v856 = vadd.f32 0.0, %v855
        %v857 = vpop.f32.mrf.mxu0
        %858 = vdwg.mxu0
        %v859 = vmul.f32 %v856, %v434
        %v860 = vld [vmem:[%s420] sm:$0xff]
        %v861 = vld [vmem:[%s9] sm:$0xff]
        %v862 = vld [vmem:[%s9 + $0x8] sm:$0xff]
        %v863 = vld [vmem:[%s9 + $0x10] sm:$0xff]
        %v864 = vld [vmem:[%s9 + $0x18] sm:$0xff]
        %v865 = vld [vmem:[%s10] sm:$0xff]
        %v866 = vld [vmem:[%s10 + $0x8] sm:$0xff]
        %v867 = vld [vmem:[%s10 + $0x10] sm:$0xff]
        %v868 = vld [vmem:[%s10 + $0x18] sm:$0xff]
        %v869 = vld [vmem:[%s10 + $0x20] sm:$0xff]
        %v870 = vld [vmem:[%s10 + $0x28] sm:$0xff]
        %v871 = vld [vmem:[%s10 + $0x30] sm:$0xff]
        %v872 = vld [vmem:[%s10 + $0x38] sm:$0xff]
        %v873 = vld [vmem:[%s10 + $0x40] sm:$0xff]
        %v874 = vld [vmem:[%s10 + $0x48] sm:$0xff]
        %v875 = vld [vmem:[%s10 + $0x50] sm:$0xff]
        %v876 = vld [vmem:[%s10 + $0x58] sm:$0xff]
        %v877 = vld [vmem:[%s10 + $0x60] sm:$0xff]
        %v878 = vld [vmem:[%s10 + $0x68] sm:$0xff]
        %v879 = vld [vmem:[%s10 + $0x70] sm:$0xff]
        %v880 = vld [vmem:[%s10 + $0x78] sm:$0xff]
        %881 = vmatprep.subr.mxu0 0.0
        %882 = vmatpush1.msra.mxu0 %v880
        %883 = vmatprep.subr.mxu0 0.0
        %884 = vmatpush1.msra.mxu0 %v879
        %885 = vmatprep.subr.mxu0 0.0
        %886 = vmatpush1.msra.mxu0 %v878
        %887 = vmatprep.subr.mxu0 0.0
        %888 = vmatpush1.msra.mxu0 %v877
        %889 = vmatprep.subr.mxu0 0.0
        %890 = vmatpush1.msra.mxu0 %v876
        %891 = vmatprep.subr.mxu0 0.0
        %892 = vmatpush1.msra.mxu0 %v875
        %893 = vmatprep.subr.mxu0 0.0
        %894 = vmatpush1.msra.mxu0 %v874
        %895 = vmatprep.subr.mxu0 0.0
        %896 = vmatpush1.msra.mxu0 %v873
        %897 = vmatprep.subr.mxu0 0.0
        %898 = vmatpush1.msra.mxu0 %v872
        %899 = vmatprep.subr.mxu0 0.0
        %900 = vmatpush1.msra.mxu0 %v871
        %901 = vmatprep.subr.mxu0 0.0
        %902 = vmatpush1.msra.mxu0 %v870
        %903 = vmatprep.subr.mxu0 0.0
        %904 = vmatpush1.msra.mxu0 %v869
        %905 = vmatprep.subr.mxu0 0.0
        %906 = vmatpush1.msra.mxu0 %v868
        %907 = vmatprep.subr.mxu0 0.0
        %908 = vmatpush1.msra.mxu0 %v867
        %909 = vmatprep.subr.mxu0 0.0
        %910 = vmatpush1.msra.mxu0 %v866
        %911 = vmatprep.subr.mxu0 0.0
        %912 = vmatpush1.msra.mxu0 %v865
        %913 = vmatprep.subr.mxu0 0.0
        %914 = vmatpush2.msra.mxu0 0.0
        %915 = vmatprep.subr.mxu0 0.0
        %916 = vmatpush2.msra.mxu0 0.0
        %917 = vmatprep.subr.mxu0 0.0
        %918 = vmatpush2.msra.mxu0 0.0
        %919 = vmatprep.subr.mxu0 0.0
        %920 = vmatpush2.msra.mxu0 0.0
        %921 = vmatprep.subr.mxu0 0.0
        %922 = vmatpush2.msra.mxu0 0.0
        %923 = vmatprep.subr.mxu0 0.0
        %924 = vmatpush2.msra.mxu0 0.0
        %925 = vmatprep.subr.mxu0 0.0
        %926 = vmatpush2.msra.mxu0 0.0
        %927 = vmatprep.subr.mxu0 0.0
        %928 = vmatpush2.msra.mxu0 0.0
        %929 = vmatprep.subr.mxu0 0.0
        %930 = vmatpush2.msra.mxu0 0.0
        %931 = vmatprep.subr.mxu0 0.0
        %932 = vmatpush2.msra.mxu0 0.0
        %933 = vmatprep.subr.mxu0 0.0
        %934 = vmatpush2.msra.mxu0 0.0
        %935 = vmatprep.subr.mxu0 0.0
        %936 = vmatpush2.msra.mxu0 0.0
        %937 = vmatprep.subr.mxu0 0.0
        %938 = vmatpush2.msra.mxu0 0.0
        %939 = vmatprep.subr.mxu0 0.0
        %940 = vmatpush2.msra.mxu0 0.0
        %941 = vmatprep.subr.mxu0 0.0
        %942 = vmatpush2.msra.mxu0 0.0
        %943 = vmatprep.subr.mxu0 0.0
        %944 = vmatpush2.msra.mxu0 0.0
        %945 = vmatprep.mubr.f32.mxu0 0.0
        %946 = vmatmul.mubr.f32.gmra.mxu0 %v859
        %v947 = vpop.f32.mrf.mxu0
        %v948 = vadd.f32 0.0, %v947
        %v949 = vpop.f32.mrf.mxu0
        %950 = vdwg.mxu0
        %v952 = vsel %vm440, %v860, 0
        %954 = vmatprep.subr.mxu0 0.0
        %955 = vmatpush1.msra.mxu0 0.0
        %956 = vmatprep.subr.mxu0 0.0
        %957 = vmatpush1.msra.mxu0 0.0
        %958 = vmatprep.subr.mxu0 0.0
        %959 = vmatpush1.msra.mxu0 0.0
        %960 = vmatprep.subr.mxu0 0.0
        %961 = vmatpush1.msra.mxu0 0.0
        %962 = vmatprep.subr.mxu0 0.0
        %963 = vmatpush1.msra.mxu0 0.0
        %964 = vmatprep.subr.mxu0 0.0
        %965 = vmatpush1.msra.mxu0 0.0
        %966 = vmatprep.subr.mxu0 0.0
        %967 = vmatpush1.msra.mxu0 0.0
        %968 = vmatprep.subr.mxu0 0.0
        %969 = vmatpush1.msra.mxu0 0.0
        %970 = vmatprep.subr.mxu0 0.0
        %971 = vmatpush1.msra.mxu0 0.0
        %972 = vmatprep.subr.mxu0 0.0
        %973 = vmatpush1.msra.mxu0 0.0
        %974 = vmatprep.subr.mxu0 0.0
        %975 = vmatpush1.msra.mxu0 0.0
        %976 = vmatprep.subr.mxu0 0.0
        %977 = vmatpush1.msra.mxu0 0.0
        %978 = vmatprep.subr.mxu0 0.0
        %979 = vmatpush1.msra.mxu0 %v864
        %980 = vmatprep.subr.mxu0 0.0
        %981 = vmatpush1.msra.mxu0 %v863
        %982 = vmatprep.subr.mxu0 0.0
        %983 = vmatpush1.msra.mxu0 %v862
        %984 = vmatprep.subr.mxu0 0.0
        %985 = vmatpush1.msra.mxu0 %v861
        %986 = vmatprep.subr.mxu0 0.0
        %987 = vmatpush2.msra.mxu0 0.0
        %988 = vmatprep.subr.mxu0 0.0
        %989 = vmatpush2.msra.mxu0 0.0
        %990 = vmatprep.subr.mxu0 0.0
        %991 = vmatpush2.msra.mxu0 0.0
        %992 = vmatprep.subr.mxu0 0.0
        %993 = vmatpush2.msra.mxu0 0.0
        %994 = vmatprep.subr.mxu0 0.0
        %995 = vmatpush2.msra.mxu0 0.0
        %996 = vmatprep.subr.mxu0 0.0
        %997 = vmatpush2.msra.mxu0 0.0
        %998 = vmatprep.subr.mxu0 0.0
        %999 = vmatpush2.msra.mxu0 0.0
        %1000 = vmatprep.subr.mxu0 0.0
        %1001 = vmatpush2.msra.mxu0 0.0
        %1002 = vmatprep.subr.mxu0 0.0
        %1003 = vmatpush2.msra.mxu0 0.0
        %1004 = vmatprep.subr.mxu0 0.0
        %1005 = vmatpush2.msra.mxu0 0.0
        %1006 = vmatprep.subr.mxu0 0.0
        %1007 = vmatpush2.msra.mxu0 0.0
        %1008 = vmatprep.subr.mxu0 0.0
        %1009 = vmatpush2.msra.mxu0 0.0
        %1010 = vmatprep.subr.mxu0 0.0
        %1011 = vmatpush2.msra.mxu0 0.0
        %1012 = vmatprep.subr.mxu0 0.0
        %1013 = vmatpush2.msra.mxu0 0.0
        %1014 = vmatprep.subr.mxu0 0.0
        %1015 = vmatpush2.msra.mxu0 0.0
        %1016 = vmatprep.subr.mxu0 0.0
        %1017 = vmatpush2.msra.mxu0 0.0
        %1018 = vmatprep.mubr.f32.mxu0 0.0
        %1019 = vmatmul.mubr.f32.gmra.mxu0 %v952
        %v1020 = vpop.f32.mrf.mxu0
        %v1021 = vadd.f32 %v948, %v1020
        %v1022 = vpop.f32.mrf.mxu0
        %1023 = vdwg.mxu0
        %v1024 = vmax.f32 %v1021, 0.0
        %1025 = vst.msk [vmem:[%s416] sm:$0xff] %vm440, %v1024
        %s1026 = sand.u32 %s284, 1
        %s1027 = scalar_lea.sflag [#allocation3], %s1026
        %s1028 = sand.u32 %s284, 1
        %s1029 = smul.addr %s1028, 8
        %s1030 = scalar_lea.vmem [#allocation2], %s1029
        // Predicated region
        $region65: #{tpu_custom_call.1} parent=63 // pred_check
          %p1031 = pneg %p294
        $region66: #{tpu_custom_call.1} parent=63 // pred_check_branch
          %1033 = sbr.rel (%p1031) target = $region68
        $region67: #{tpu_custom_call.1} parent=63 // pred_region
          %s1035 = ssub.s32 128, 128
          %1036 = vsyncadd %s1027, %s1035
          %s1037 = smul.addr %s25, 128
          %s1038 = scalar_lea.hbm %s11, %s1037
          %s1040 = sshll.u32 %s1030, 4
          %s1041 = int_to_ptr.vmem [resolvable:$true] %s1040
          %1043 = dma.vmem_to_hbm [thread:$0]  %s1041, 128, %s1038, %s1027
        $region68: #{tpu_custom_call.1} parent=63 // pred_fallthru
          _
      $region64: #{tpu_custom_call.1} parent=5 // pred_fallthru
        _
      %p1044 = scmp.le.s32.totalorder 2, %s20
      // Predicated region
      $region69: #{tpu_custom_call.1} parent=5 // pred_check
        %p1045 = pneg %p1044
      $region70: #{tpu_custom_call.1} parent=5 // pred_check_branch
        %1047 = sbr.rel (%p1045) target = $region72
      $region71: #{tpu_custom_call.1} parent=5 // pred_region
        %s1048 = ssub.s32 %s20, 2
        // Predicated region
        $region73: #{tpu_custom_call.1} parent=71 // pred_check
          %p1049 = pneg %p300
        $region74: #{tpu_custom_call.1} parent=71 // pred_check_branch
          %1051 = sbr.rel (%p1049) target = $region76
        $region75: #{tpu_custom_call.1} parent=71 // pred_region
          %s1052 = sand.u32 %s285, 1
          %s1053 = scalar_lea.sflag [#allocation3], %s1052
          %s1054 = sand.u32 %s285, 1
          %s1055 = smul.addr %s1054, 8
          %s1056 = scalar_lea.vmem [#allocation2], %s1055
          %1057 = dma.done %s1053, 128
        $region76: #{tpu_custom_call.1} parent=71 // pred_fallthru
          _
      $region72: #{tpu_custom_call.1} parent=5 // pred_fallthru
        _
    $region6: #{tpu_custom_call.1} parent=1 // loop_footer
      %s24 = sadd.s32 1, %s20
    $region7: #{tpu_custom_call.1} parent=1 // loop_footer_branch
      %19 = sbr.rel target = $region3
    $region8: #{tpu_custom_call.1} parent=1 // loop_exit
      _
    %1058 = vsyncpa [#allocation3], 1
    %s1059 = scalar_lea.sflag [#allocation3], 1
    %1060 = vsyncpa %s1059, 1

</llo_original>
